<compile_context>
chip_gen: v6e
topology: v6e:2x2x1
jax: 0.10.0
libtpu: 0.0.40
codegen_flags: <defaults>
</compile_context>

<pallas_src>
import math

import jax
import jax.numpy as jnp
import numpy as np
from jax.experimental import pallas as pl
from jax.experimental.pallas import tpu as pltpu


# --------------------------------------------------------------------------
# Forward: exact semantics of Proxies.forward() -> return P.
# Pure alias, no pallas_call, no copy, no HBM traffic (review item #1).
# --------------------------------------------------------------------------
def proxies_forward(proxies: jax.Array) -> jax.Array:
    return proxies


# --------------------------------------------------------------------------
# Pallas kernel: materialize an independent copy of P when aliasing is not
# acceptable (caller keeps the original parameter buffer alive).
# Single HBM->HBM DMA; refs stay in HBM via memory_space=pl.ANY.
# --------------------------------------------------------------------------
def _proxies_materialize_kernel(p_hbm, o_hbm, sem):
    cp = pltpu.make_async_copy(p_hbm, o_hbm, sem)
    cp.start()
    cp.wait()


@jax.jit
def proxies_materialize(proxies: jax.Array) -> jax.Array:
    return pl.pallas_call(
        _proxies_materialize_kernel,
        out_shape=jax.ShapeDtypeStruct(proxies.shape, proxies.dtype),
        in_specs=[pl.BlockSpec(memory_space=pl.ANY)],
        out_specs=pl.BlockSpec(memory_space=pl.ANY),
        scratch_shapes=[pltpu.SemaphoreType.DMA(())],
    )(proxies)


# --------------------------------------------------------------------------
# Parameter initialization (host-side, matches the torch module's __init__)
# --------------------------------------------------------------------------
def init_proxies(key, nb_classes: int, sz_embed: int, loss: str = "Proxy_AN",
                 dtype=jnp.float32):
    """Re-implementation of Proxies.__init__.

    torch: proxies = randn(nb_classes, sz_embed) [ / 8 if Proxy_NCA ], then
    nn.init.kaiming_normal_(mode='fan_out') OVERWRITES those values, so the
    effective init is N(0, 2/fan_out) with fan_out = nb_classes (dim 0 of a
    2-D tensor in torch's convention).  The `loss` argument is therefore
    intentionally ignored here — do not "fix" this later.
    """
    del loss
    std = math.sqrt(2.0 / nb_classes)
    return (jax.random.normal(key, (nb_classes, sz_embed), dtype=jnp.float32)
            * std).astype(dtype)


# --------------------------------------------------------------------------
# Self-test
# --------------------------------------------------------------------------
if __name__ == "__main__":
    nb_classes, sz_embed = 32, 128  # small, lane-aligned example shapes

    key = jax.random.PRNGKey(0)
    proxies = init_proxies(key, nb_classes, sz_embed, loss="Proxy_AN")
    expected = np.asarray(proxies)

    # forward(): pure alias — exact semantics of the torch module, zero cost.
    p_fwd = proxies_forward(proxies)
    assert p_fwd is proxies

    # Pallas materializing copy (single HBM->HBM DMA); run once and verify.
    out = proxies_materialize(proxies)
    out = jax.block_until_ready(out)

    assert out.shape == (nb_classes, sz_embed)
    assert out.dtype == proxies.dtype
    assert np.array_equal(np.asarray(out), expected)
    # forward() result must be P exactly as well.
    assert np.array_equal(np.asarray(p_fwd), expected)

    print("KERNEL_OK")
</pallas_src>

<mosaic_0001>
module attributes {stable_mosaic.version = 11 : i64} {
  func.func @_proxies_materialize_kernel(%arg0: memref<32x128xf32, #tpu.memory_space<any>>, %arg1: memref<32x128xf32, #tpu.memory_space<any>>, %arg2: memref<!tpu.dma_semaphore, #tpu.memory_space<semaphore_mem>>) attributes {dimension_semantics = [], scalar_prefetch = 0 : i64, scratch_operands = 1 : i64, tpu.core_type = #tpu.core_type<tc>} {
    tpu.enqueue_dma source(%arg0 : memref<32x128xf32, #tpu.memory_space<any>>) target(%arg1 : memref<32x128xf32, #tpu.memory_space<any>>) target_semaphore(%arg2 : memref<!tpu.dma_semaphore, #tpu.memory_space<semaphore_mem>>)
    tpu.wait_dma2 semaphore(%arg2 : memref<!tpu.dma_semaphore, #tpu.memory_space<semaphore_mem>>) src(%arg0 : memref<32x128xf32, #tpu.memory_space<any>>) dst(%arg1 : memref<32x128xf32, #tpu.memory_space<any>>)
    return
  }
}

</mosaic_0001>

<llo_original>
// kernel: proxies_materialize.1
$region0: #{proxies_materialize.1}
  #allocation0 [shape = 'u32[]', space=smem, size = 0x4, offset = 0x4, fixed_abs, tag = 'smem constant byte address 0x4 - core index']
  #allocation1 [shape = 'u32[144,128]{1,0:T(1,128)}', space=vmem, size = 0x12000, scoped, tag = 'internal scratch']
  #allocation2 [shape = 's32[1]{0}', space=sflag, size = 0x4, scoped, tag = 'scratch operand']
  #allocation3 [shape = 's32[]', space=sflag, size = 0x4, offset = 0, fixed_abs, tag = 'sflag constant byte address 0x0 - dummy sync flag']
  #allocation4 [shape = 'u32[0]{0}', space=smem, size = 0, offset = 0, fixed_abs, tag = 'smem constant byte address 0x0 - null']
  %s0 = inlined_call_operand.hbm [shape: f32[32,128], index: 0, kind: input, shape index: {}]
  %s1 = inlined_call_operand.hbm [shape: f32[32,128], index: 1, kind: output, shape index: {}]
  %s2 = sld [smem:[#allocation0]]
  $region2: #{proxies_materialize.1} parent=0
    _
  %s4 = ssub.s32 1, %s2
  %s5 = scalar_select 0, %s4, %s2
  %s7 = sshll.u32 1, 14
  %s8 = sxor.u32 4294967295, %s7
  %12 = dma.general %s0, 512, %s1, [#allocation2], 131072, [#allocation4], 0, 0
  %s13 = smul.u32 32, 1
  %s14 = sshll.u32 %s13, 4
  %15 = dma.done [#allocation2], %s14
  %16 = vsyncmov [#allocation2]
  %s17 = vpop.sfrf %16
  %p18 = scmp.eq.s32.totalorder %s17, 0
  %p19 = pneg %p18
  %21 = shalt.err (%p19)

</llo_original>
